<compile_context>
chip_gen: v6e
topology: v6e:2x2x1
jax: 0.10.0
libtpu: 0.0.40
codegen_flags: <defaults>
</compile_context>

<pallas_src>
import functools

import jax
import jax.numpy as jnp
from jax.experimental import pallas as pl
from jax.experimental.pallas import tpu as pltpu


def _round_up(x, m):
    return (x + m - 1) // m * m


def _cdiv(a, b):
    return -(-a // b)


def _critic_kernel(x_ref, w1_ref, b1_ref, w2_ref, b2_ref, w3_ref, b3_ref, o_ref):
    x = x_ref[...]                                                     # (TM, D) f32
    # Layer 1: Linear + ReLU.  bf16 operands on the MXU, f32 accumulation.
    h1 = jnp.dot(x.astype(jnp.bfloat16), w1_ref[...],
                 preferred_element_type=jnp.float32) + b1_ref[...]     # (TM, 256) f32
    h1 = jnp.maximum(h1, 0.0)
    # Layer 2: Linear + ReLU.
    h2 = jnp.dot(h1.astype(jnp.bfloat16), w2_ref[...],
                 preferred_element_type=jnp.float32) + b2_ref[...]     # (TM, 256) f32
    h2 = jnp.maximum(h2, 0.0)
    # Layer 3 (256 -> 1): VPU multiply + cross-lane reduce, all f32.
    v = jnp.sum(h2 * w3_ref[...], axis=-1, keepdims=True) + b3_ref[0, 0]  # (TM, 1)
    o_ref[...] = v.astype(o_ref.dtype)


@functools.partial(jax.jit, static_argnames=("tile_m",))
def critic_forward(state, params, tile_m=2048):
    """state: (B, input_dims) f32. Returns value: (B, 1) f32."""
    w1, b1, w2, b2, w3, b3 = params
    B, D = state.shape
    F1 = w1.shape[1]          # 256
    F2 = w2.shape[1]          # 256

    # Validate/normalize the tile: multiple of 128 sublane-friendly rows.
    tile_m = _round_up(max(int(tile_m), 128), 128)
    # Cap TM so the batch splits into >= 2 grid steps when it can (v7x megacore).
    half_batch = _round_up(_cdiv(_round_up(B, 128), 2), 128)
    TM = min(tile_m, half_batch)
    num_tiles = _cdiv(B, TM)

    state = state.astype(jnp.float32)

    out = pl.pallas_call(
        _critic_kernel,
        out_shape=jax.ShapeDtypeStruct((B, 1), jnp.float32),
        grid=(num_tiles,),
        in_specs=[
            # state: streamed per batch tile; last block dim equals full D (no pad).
            pl.BlockSpec((TM, D), lambda i: (i, 0)),
            # weights/biases: VMEM-resident, constant index map, single-buffered.
            pl.BlockSpec((D, F1), lambda i: (0, 0), pipeline_mode=pl.Buffered(1)),
            pl.BlockSpec((1, F1), lambda i: (0, 0), pipeline_mode=pl.Buffered(1)),
            pl.BlockSpec((F1, F2), lambda i: (0, 0), pipeline_mode=pl.Buffered(1)),
            pl.BlockSpec((1, F2), lambda i: (0, 0), pipeline_mode=pl.Buffered(1)),
            pl.BlockSpec((1, F2), lambda i: (0, 0), pipeline_mode=pl.Buffered(1)),
            # b3 scalar lives in SMEM.
            pl.BlockSpec(memory_space=pltpu.MemorySpace.SMEM),
        ],
        out_specs=pl.BlockSpec((TM, 1), lambda i: (i, 0)),
        compiler_params=pltpu.CompilerParams(
            dimension_semantics=("parallel",),        # megacore split on v7x
        ),
    )(state, w1, b1, w2, b2, w3, b3)

    return out


def init_params(key, input_dims, fc1_dims=256, fc2_dims=256):
    """Mimics nn.Linear's U(-1/sqrt(fan_in), 1/sqrt(fan_in)) init.
    w1/w2 stored as bf16 (in_features, out_features) for the MXU fast path;
    w3 stored as an f32 (1, 256) row for the VPU reduce; biases f32,
    b3 is a (1, 1) f32 scalar."""
    k = jax.random.split(key, 6)

    def lin(kw, kb, fan_in, fan_out):
        bound = 1.0 / jnp.sqrt(jnp.float32(fan_in))
        w = jax.random.uniform(kw, (fan_in, fan_out), jnp.float32, -bound, bound)
        b = jax.random.uniform(kb, (1, fan_out), jnp.float32, -bound, bound)
        return w, b

    w1, b1 = lin(k[0], k[1], input_dims, fc1_dims)
    w2, b2 = lin(k[2], k[3], fc1_dims, fc2_dims)
    w3c, b3 = lin(k[4], k[5], fc2_dims, 1)            # (256, 1), (1, 1)
    w3 = w3c.T                                        # (1, 256) f32 row
    return (w1.astype(jnp.bfloat16), b1,
            w2.astype(jnp.bfloat16), b2,
            w3, b3)


# TODO(synk): optimizer (Adam), checkpoint save/load, and device placement from the
# PyTorch module are training/IO concerns with no Pallas forward-pass equivalent.

if __name__ == "__main__":
    key = jax.random.PRNGKey(0)
    k_state, k_params = jax.random.split(key)

    batch = 8
    input_dims = 8           # e.g. an 8-dim observation vector

    state = jax.random.normal(k_state, (batch, input_dims), jnp.float32)
    params = init_params(k_params, input_dims)

    value = jax.block_until_ready(critic_forward(state, params))

    # Pure-JAX reference with the same bf16-operand / f32-accumulation choices.
    w1, b1, w2, b2, w3, b3 = params
    h1 = jnp.maximum(jnp.dot(state.astype(jnp.bfloat16), w1,
                             preferred_element_type=jnp.float32) + b1, 0.0)
    h2 = jnp.maximum(jnp.dot(h1.astype(jnp.bfloat16), w2,
                             preferred_element_type=jnp.float32) + b2, 0.0)
    ref = jnp.sum(h2 * w3, axis=-1, keepdims=True) + b3

    assert value.shape == (batch, 1)
    assert jnp.allclose(value, ref, atol=1e-3, rtol=1e-3)

    print("KERNEL_OK")
</pallas_src>

<mosaic_0001>
module attributes {stable_mosaic.version = 11 : i64} {
  func.func @_critic_kernel(%arg0: i32, %arg1: memref<128x8xf32, #tpu.memory_space<vmem>>, %arg2: memref<8x256xbf16, #tpu.memory_space<vmem>>, %arg3: memref<1x256xf32, #tpu.memory_space<vmem>>, %arg4: memref<256x256xbf16, #tpu.memory_space<vmem>>, %arg5: memref<1x256xf32, #tpu.memory_space<vmem>>, %arg6: memref<1x256xf32, #tpu.memory_space<vmem>>, %arg7: memref<1x1xf32, #tpu.memory_space<smem>>, %arg8: memref<128x1xf32, #tpu.memory_space<vmem>>) attributes {dimension_semantics = [#tpu.dimension_semantics<parallel>], iteration_bounds = array<i64: 1>, scalar_prefetch = 0 : i64, scratch_operands = 0 : i64, tpu.core_type = #tpu.core_type<tc>, window_params = [{transform_indices = @transform_0, window_bounds = array<i64: 128, 8>}, {pipeline_mode = #tpu.pipeline_mode<synchronous>, transform_indices = @transform_1, window_bounds = array<i64: 8, 256>}, {pipeline_mode = #tpu.pipeline_mode<synchronous>, transform_indices = @transform_2, window_bounds = array<i64: 1, 256>}, {pipeline_mode = #tpu.pipeline_mode<synchronous>, transform_indices = @transform_3, window_bounds = array<i64: 256, 256>}, {pipeline_mode = #tpu.pipeline_mode<synchronous>, transform_indices = @transform_4, window_bounds = array<i64: 1, 256>}, {pipeline_mode = #tpu.pipeline_mode<synchronous>, transform_indices = @transform_5, window_bounds = array<i64: 1, 256>}, {transform_indices = @transform_6, window_bounds = array<i64: 1, 1>}, {transform_indices = @transform_7, window_bounds = array<i64: 128, 1>}]} {
    %c0 = arith.constant 0 : index
    %c0_0 = arith.constant 0 : index
    %0 = vector.load %arg1[%c0, %c0_0] : memref<128x8xf32, #tpu.memory_space<vmem>>, vector<128x8xf32>
    %1 = arith.truncf %0 : vector<128x8xf32> to vector<128x8xbf16>
    %c0_1 = arith.constant 0 : index
    %c0_2 = arith.constant 0 : index
    %2 = vector.load %arg2[%c0_1, %c0_2] : memref<8x256xbf16, #tpu.memory_space<vmem>>, vector<8x256xbf16>
    %cst = arith.constant dense<0.000000e+00> : vector<128x256xf32>
    %3 = tpu.matmul %1, %2, %cst {dimension_numbers = #tpu.dot_dimension_numbers<[1], [0], [0], [1], [0, 0, 1, 1], [], []>} : vector<128x8xbf16>, vector<8x256xbf16>, vector<128x256xf32> -> vector<128x256xf32>
    %c0_3 = arith.constant 0 : index
    %c0_4 = arith.constant 0 : index
    %4 = vector.load %arg3[%c0_3, %c0_4] : memref<1x256xf32, #tpu.memory_space<vmem>>, vector<1x256xf32>
    %5 = vector.broadcast %4 : vector<1x256xf32> to vector<128x256xf32>
    %6 = arith.addf %3, %5 : vector<128x256xf32>
    %cst_5 = arith.constant 0.000000e+00 : f32
    %7 = vector.broadcast %cst_5 : f32 to vector<128x256xf32>
    %8 = arith.maximumf %6, %7 : vector<128x256xf32>
    %9 = arith.truncf %8 : vector<128x256xf32> to vector<128x256xbf16>
    %c0_6 = arith.constant 0 : index
    %c0_7 = arith.constant 0 : index
    %10 = vector.load %arg4[%c0_6, %c0_7] : memref<256x256xbf16, #tpu.memory_space<vmem>>, vector<256x256xbf16>
    %cst_8 = arith.constant dense<0.000000e+00> : vector<128x256xf32>
    %11 = tpu.matmul %9, %10, %cst_8 {dimension_numbers = #tpu.dot_dimension_numbers<[1], [0], [0], [1], [0, 0, 1, 1], [], []>} : vector<128x256xbf16>, vector<256x256xbf16>, vector<128x256xf32> -> vector<128x256xf32>
    %c0_9 = arith.constant 0 : index
    %c0_10 = arith.constant 0 : index
    %12 = vector.load %arg5[%c0_9, %c0_10] : memref<1x256xf32, #tpu.memory_space<vmem>>, vector<1x256xf32>
    %13 = vector.broadcast %12 : vector<1x256xf32> to vector<128x256xf32>
    %14 = arith.addf %11, %13 : vector<128x256xf32>
    %cst_11 = arith.constant 0.000000e+00 : f32
    %15 = vector.broadcast %cst_11 : f32 to vector<128x256xf32>
    %16 = arith.maximumf %14, %15 : vector<128x256xf32>
    %c0_12 = arith.constant 0 : index
    %c0_13 = arith.constant 0 : index
    %17 = vector.load %arg6[%c0_12, %c0_13] : memref<1x256xf32, #tpu.memory_space<vmem>>, vector<1x256xf32>
    %18 = vector.broadcast %17 : vector<1x256xf32> to vector<128x256xf32>
    %19 = arith.mulf %16, %18 : vector<128x256xf32>
    %cst_14 = arith.constant dense<0.000000e+00> : vector<128xf32>
    %20 = vector.multi_reduction <add>, %19, %cst_14 [1] : vector<128x256xf32> to vector<128xf32>
    %21 = vector.shape_cast %20 : vector<128xf32> to vector<128x1xf32>
    %c0_15 = arith.constant 0 : index
    %c0_16 = arith.constant 0 : index
    %22 = memref.load %arg7[%c0_15, %c0_16] : memref<1x1xf32, #tpu.memory_space<smem>>
    %23 = vector.broadcast %22 : f32 to vector<128x1xf32>
    %24 = arith.addf %21, %23 : vector<128x1xf32>
    %c0_17 = arith.constant 0 : index
    %c0_18 = arith.constant 0 : index
    %25 = vector.load %arg8[%c0_17, %c0_18] : memref<128x1xf32, #tpu.memory_space<vmem>>, vector<128x1xf32>
    tpu.vector_store %arg8[%c0_17, %c0_18], %24 {strides = array<i32>} : memref<128x1xf32, #tpu.memory_space<vmem>>, vector<128x1xf32>,
    return
  }
  func.func @transform_0(%arg0: i32) -> (i32, i32) {
    %c0_i32 = arith.constant 0 : i32
    %c0_i32_0 = arith.constant 0 : i32
    return %arg0, %c0_i32 : i32, i32
  }
  func.func @transform_1(%arg0: i32) -> (i32, i32) {
    %c0_i32 = arith.constant 0 : i32
    %c0_i32_0 = arith.constant 0 : i32
    %c0_i32_1 = arith.constant 0 : i32
    return %c0_i32, %c0_i32_0 : i32, i32
  }
  func.func @transform_2(%arg0: i32) -> (i32, i32) {
    %c0_i32 = arith.constant 0 : i32
    %c0_i32_0 = arith.constant 0 : i32
    %c0_i32_1 = arith.constant 0 : i32
    return %c0_i32, %c0_i32_0 : i32, i32
  }
  func.func @transform_3(%arg0: i32) -> (i32, i32) {
    %c0_i32 = arith.constant 0 : i32
    %c0_i32_0 = arith.constant 0 : i32
    %c0_i32_1 = arith.constant 0 : i32
    return %c0_i32, %c0_i32_0 : i32, i32
  }
  func.func @transform_4(%arg0: i32) -> (i32, i32) {
    %c0_i32 = arith.constant 0 : i32
    %c0_i32_0 = arith.constant 0 : i32
    %c0_i32_1 = arith.constant 0 : i32
    return %c0_i32, %c0_i32_0 : i32, i32
  }
  func.func @transform_5(%arg0: i32) -> (i32, i32) {
    %c0_i32 = arith.constant 0 : i32
    %c0_i32_0 = arith.constant 0 : i32
    %c0_i32_1 = arith.constant 0 : i32
    return %c0_i32, %c0_i32_0 : i32, i32
  }
  func.func @transform_6(%arg0: i32) -> (i32, i32) {
    %c0_i32 = arith.constant 0 : i32
    %c0_i32_0 = arith.constant 0 : i32
    %c0_i32_1 = arith.constant 0 : i32
    return %c0_i32, %c0_i32_0 : i32, i32
  }
  func.func @transform_7(%arg0: i32) -> (i32, i32) {
    %c0_i32 = arith.constant 0 : i32
    %c0_i32_0 = arith.constant 0 : i32
    return %arg0, %c0_i32 : i32, i32
  }
}

</mosaic_0001>

<llo_original>
// kernel: critic_forward.1
$region0: #{critic_forward.1}
  #allocation0 [shape = 'u32[]', space=smem, size = 0x4, offset = 0x4, fixed_abs, tag = 'smem constant byte address 0x4 - core index']
  #allocation1 [shape = 'u32[144,128]{1,0:T(1,128)}', space=vmem, size = 0x12000, scoped, tag = 'internal scratch']
  #allocation2 [shape = 'f32[1,1]{1,0:T(1,128)S(6)}', space=smem, size = 0x200, scoped, tag = 'scoped memory for critic_forward.1']
  %s0 = inlined_call_operand.hbm [shape: f32[8,8], index: 0, kind: input, shape index: {}]
  %s1 = inlined_call_operand.hbm [shape: bf16[8,256], index: 1, kind: input, shape index: {}]
  %s2 = inlined_call_operand.vmem [shape: f32[1,256], index: 2, kind: input, shape index: {}]
  %s3 = inlined_call_operand.hbm [shape: bf16[256,256], index: 3, kind: input, shape index: {}]
  %s4 = inlined_call_operand.vmem [shape: f32[1,256], index: 4, kind: input, shape index: {}]
  %s5 = inlined_call_operand.vmem [shape: f32[1,256], index: 5, kind: input, shape index: {}]
  %s6 = inlined_call_operand.<no memory space> [shape: f32[1,1], index: 6, kind: input, shape index: {}]
  %s7 = inlined_call_operand.vmem [shape: f32[8,1], index: 7, kind: output, shape index: {}]
  %s8 = sld [smem:[#allocation0]]
  $region84: #{critic_forward.1} parent=0
    _
  %s10 = ssub.s32 1, %s8
  %s11 = scalar_select 0, %s10, %s8
  %12 = sst [smem:[#allocation2]] %s6
  $region1: #{critic_forward.1} parent=0
    #allocation3 [shape = 'u8[65536]{0}', space=vmem, size = 0x10000, scoped, tag = 'input window, operand 0, single buffered']
    #allocation4 [shape = 's32[1]{0}', space=sflag, size = 0x4, scoped, tag = 'scoped memory for critic_forward.1']
    #allocation5 [shape = 'u8[4096]{0}', space=vmem, size = 0x1000, scoped, tag = 'input window, operand 1, single buffered']
    #allocation6 [shape = 's32[1]{0}', space=sflag, size = 0x4, scoped, tag = 'scoped memory for critic_forward.1']
    #allocation7 [shape = 'u8[131072]{0}', space=vmem, size = 0x20000, scoped, tag = 'input window, operand 3, single buffered']
    #allocation8 [shape = 'u8[65536]{0}', space=vmem, size = 0x10000, scoped, tag = 'output window, operand 0, single buffered']
    %13 = vsyncpa [#allocation4], 0
    %14 = vsyncpa [#allocation6], 0
    // Predicated region
    $region2: #{critic_forward.1} parent=1 // pred_check
      _
    $region3: #{critic_forward.1} parent=1 // pred_check_branch
      %16 = sbr.rel (0) target = $region5
    $region4: #{critic_forward.1} parent=1 // pred_region
      %s18 = ssub.s32 2048, 128
      %19 = vsyncadd [#allocation4], %s18
      %s20 = sshll.u32 [#allocation3], 4
      %s21 = int_to_ptr.vmem [resolvable:$true] %s20
      %26 = dma.hbm_to_vmem [thread:$0]  %s0, 128, %s21, [#allocation4], 128, 128, 8
    $region5: #{critic_forward.1} parent=1 // pred_fallthru
      _
    // Predicated region
    $region6: #{critic_forward.1} parent=1 // pred_check
      _
    $region7: #{critic_forward.1} parent=1 // pred_check_branch
      %28 = sbr.rel (0) target = $region9
    $region8: #{critic_forward.1} parent=1 // pred_region
      %s30 = ssub.s32 128, 128
      %31 = vsyncadd [#allocation6], %s30
      %s33 = sshll.u32 [#allocation5], 4
      %s34 = int_to_ptr.vmem [resolvable:$true] %s33
      %36 = dma.hbm_to_vmem [thread:$0]  %s1, 128, %s34, [#allocation6]
    $region9: #{critic_forward.1} parent=1 // pred_fallthru
      _
    // Predicated region
    $region10: #{critic_forward.1} parent=1 // pred_check
      _
    $region11: #{critic_forward.1} parent=1 // pred_check_branch
      %38 = sbr.rel (0) target = $region13
    $region12: #{critic_forward.1} parent=1 // pred_region
      _
    $region13: #{critic_forward.1} parent=1 // pred_fallthru
      _
    // Predicated region
    $region14: #{critic_forward.1} parent=1 // pred_check
      _
    $region15: #{critic_forward.1} parent=1 // pred_check_branch
      %40 = sbr.rel (0) target = $region17
    $region16: #{critic_forward.1} parent=1 // pred_region
      %s42 = ssub.s32 4096, 4096
      %43 = vsyncadd [#allocation6], %s42
      %s44 = sshll.u32 [#allocation7], 4
      %s45 = int_to_ptr.vmem [resolvable:$true] %s44
      %50 = dma.hbm_to_vmem [thread:$0]  %s3, 4096, %s45, [#allocation6], 128, 128, 8
    $region17: #{critic_forward.1} parent=1 // pred_fallthru
      _
    // Predicated region
    $region18: #{critic_forward.1} parent=1 // pred_check
      _
    $region19: #{critic_forward.1} parent=1 // pred_check_branch
      %52 = sbr.rel (0) target = $region21
    $region20: #{critic_forward.1} parent=1 // pred_region
      _
    $region21: #{critic_forward.1} parent=1 // pred_fallthru
      _
    // Predicated region
    $region22: #{critic_forward.1} parent=1 // pred_check
      _
    $region23: #{critic_forward.1} parent=1 // pred_check_branch
      %54 = sbr.rel (0) target = $region25
    $region24: #{critic_forward.1} parent=1 // pred_region
      _
    $region25: #{critic_forward.1} parent=1 // pred_fallthru
      _
    // Predicated region
    $region26: #{critic_forward.1} parent=1 // pred_check
      _
    $region27: #{critic_forward.1} parent=1 // pred_check_branch
      %56 = sbr.rel (0) target = $region29
    $region28: #{critic_forward.1} parent=1 // pred_region
      _
    $region29: #{critic_forward.1} parent=1 // pred_fallthru
      _
    // Predicated region
    $region30: #{critic_forward.1} parent=1 // pred_check
      _
    $region31: #{critic_forward.1} parent=1 // pred_check_branch
      %58 = sbr.rel (0) target = $region33
    $region32: #{critic_forward.1} parent=1 // pred_region
      %59 = dma.done [#allocation4], 2048
    $region33: #{critic_forward.1} parent=1 // pred_fallthru
      _
    // Predicated region
    $region34: #{critic_forward.1} parent=1 // pred_check
      _
    $region35: #{critic_forward.1} parent=1 // pred_check_branch
      %61 = sbr.rel (0) target = $region37
    $region36: #{critic_forward.1} parent=1 // pred_region
      %62 = dma.done [#allocation6], 128
    $region37: #{critic_forward.1} parent=1 // pred_fallthru
      _
    // Predicated region
    $region38: #{critic_forward.1} parent=1 // pred_check
      _
    $region39: #{critic_forward.1} parent=1 // pred_check_branch
      %64 = sbr.rel (0) target = $region41
    $region40: #{critic_forward.1} parent=1 // pred_region
      %65 = dma.done [#allocation6], 4096
    $region41: #{critic_forward.1} parent=1 // pred_fallthru
      _
    %v67 = vld [vmem:[#allocation3] sm:$0xff]
    %v68 = vld [vmem:[#allocation3 + $0x8] sm:$0xff]
    %v69 = vld [vmem:[#allocation3 + $0x10] sm:$0xff]
    %v70 = vld [vmem:[#allocation3 + $0x18] sm:$0xff]
    %v71 = vld [vmem:[#allocation3 + $0x20] sm:$0xff]
    %v72 = vld [vmem:[#allocation3 + $0x28] sm:$0xff]
    %v73 = vld [vmem:[#allocation3 + $0x30] sm:$0xff]
    %v74 = vld [vmem:[#allocation3 + $0x38] sm:$0xff]
    %v75 = vld [vmem:[#allocation3 + $0x40] sm:$0xff]
    %v76 = vld [vmem:[#allocation3 + $0x48] sm:$0xff]
    %v77 = vld [vmem:[#allocation3 + $0x50] sm:$0xff]
    %v78 = vld [vmem:[#allocation3 + $0x58] sm:$0xff]
    %v79 = vld [vmem:[#allocation3 + $0x60] sm:$0xff]
    %v80 = vld [vmem:[#allocation3 + $0x68] sm:$0xff]
    %v81 = vld [vmem:[#allocation3 + $0x70] sm:$0xff]
    %v82 = vld [vmem:[#allocation3 + $0x78] sm:$0xff]
    %v83 = vpack.c.bf16 %v68, %v67
    %v84 = vpack.c.bf16 %v70, %v69
    %v85 = vpack.c.bf16 %v72, %v71
    %v86 = vpack.c.bf16 %v74, %v73
    %v87 = vpack.c.bf16 %v76, %v75
    %v88 = vpack.c.bf16 %v78, %v77
    %v89 = vpack.c.bf16 %v80, %v79
    %v90 = vpack.c.bf16 %v82, %v81
    %v91 = vld [vmem:[#allocation5] sm:$0xff]
    %v92 = vld [vmem:[%s2] sm:$0x3]
    %v94 = vlaneseq
    %v95 = vshrl.u32 %v94, 7
    %v96 = vsub.s32 0, %v95
    %v97 = vrot.slane %v92, %v96
    %v98 = vlaneseq
    %v99 = vshrl.u32 %v98, 7
    %v100 = vsub.s32 1, %v99
    %v101 = vrot.slane %v92, %v100
    %v105 = vunpack.c.l.b16 %v91
    %v106 = vunpack.c.h.b16 %v91
    %v107 = vpack.c.b16 %v105, %v105
    %v108 = vpack.c.b16 %v106, %v106
    %vm109 = vcmask 64512
    %v111 = vsel %vm109, %v83, 0
    %v114 = vsel %vm109, %v84, 0
    %v117 = vsel %vm109, %v85, 0
    %v120 = vsel %vm109, %v86, 0
    %v123 = vsel %vm109, %v87, 0
    %v126 = vsel %vm109, %v88, 0
    %v129 = vsel %vm109, %v89, 0
    %v132 = vsel %vm109, %v90, 0
    %vm134 = vcmask 1043456
    %v136 = vsel %vm134, %v107, 0
    %v139 = vsel %vm134, %v108, 0
    %141 = vmatprep.subr.bf16.mxu0 0
    %142 = vmatpush1.bf16.msra.mxu0 0
    %143 = vmatprep.subr.bf16.mxu0 0
    %144 = vmatpush1.bf16.msra.mxu0 0
    %145 = vmatprep.subr.bf16.mxu0 0
    %146 = vmatpush1.bf16.msra.mxu0 0
    %147 = vmatprep.subr.bf16.mxu0 0
    %148 = vmatpush1.bf16.msra.mxu0 0
    %149 = vmatprep.subr.bf16.mxu0 0
    %150 = vmatpush1.bf16.msra.mxu0 0
    %151 = vmatprep.subr.bf16.mxu0 0
    %152 = vmatpush1.bf16.msra.mxu0 0
    %153 = vmatprep.subr.bf16.mxu0 0
    %154 = vmatpush1.bf16.msra.mxu0 0
    %155 = vmatprep.subr.bf16.mxu0 %v139
    %156 = vmatpush1.bf16.msra.mxu0 %v136
    %157 = vmatprep.subr.bf16.mxu0 0
    %158 = vmatpush2.bf16.msra.mxu0 0
    %159 = vmatprep.subr.bf16.mxu0 0
    %160 = vmatpush2.bf16.msra.mxu0 0
    %161 = vmatprep.subr.bf16.mxu0 0
    %162 = vmatpush2.bf16.msra.mxu0 0
    %163 = vmatprep.subr.bf16.mxu0 0
    %164 = vmatpush2.bf16.msra.mxu0 0
    %165 = vmatprep.subr.bf16.mxu0 0
    %166 = vmatpush2.bf16.msra.mxu0 0
    %167 = vmatprep.subr.bf16.mxu0 0
    %168 = vmatpush2.bf16.msra.mxu0 0
    %169 = vmatprep.subr.bf16.mxu0 0
    %170 = vmatpush2.bf16.msra.mxu0 0
    %171 = vmatprep.subr.bf16.mxu0 0
    %172 = vmatpush2.bf16.msra.mxu0 0
    %173 = vmatprep.mubr.bf16.mxu0 0
    %174 = vmatmul.mubr.bf16.gmra.mxu0 %v111
    %v175 = vpop.f32.mrf.mxu0
    %v176 = vadd.f32 %v97, %v175
    %v177 = vpop.f32.mrf.mxu0
    %v178 = vadd.f32 %v101, %v177
    %v179 = vpop.f32.mrf.mxu0
    %v180 = vadd.f32 %v97, %v179
    %v181 = vpop.f32.mrf.mxu0
    %v182 = vadd.f32 %v101, %v181
    %183 = vmatprep.mubr.bf16.mxu0 0
    %184 = vmatmul.mubr.bf16.gmra.mxu0 %v114
    %v185 = vpop.f32.mrf.mxu0
    %v186 = vadd.f32 %v97, %v185
    %v187 = vpop.f32.mrf.mxu0
    %v188 = vadd.f32 %v101, %v187
    %v189 = vpop.f32.mrf.mxu0
    %v190 = vadd.f32 %v97, %v189
    %v191 = vpop.f32.mrf.mxu0
    %v192 = vadd.f32 %v101, %v191
    %193 = vmatprep.mubr.bf16.mxu0 0
    %194 = vmatmul.mubr.bf16.gmra.mxu0 %v117
    %v195 = vpop.f32.mrf.mxu0
    %v196 = vadd.f32 %v97, %v195
    %v197 = vpop.f32.mrf.mxu0
    %v198 = vadd.f32 %v101, %v197
    %v199 = vpop.f32.mrf.mxu0
    %v200 = vadd.f32 %v97, %v199
    %v201 = vpop.f32.mrf.mxu0
    %v202 = vadd.f32 %v101, %v201
    %203 = vmatprep.mubr.bf16.mxu0 0
    %204 = vmatmul.mubr.bf16.gmra.mxu0 %v120
    %v205 = vpop.f32.mrf.mxu0
    %v206 = vadd.f32 %v97, %v205
    %v207 = vpop.f32.mrf.mxu0
    %v208 = vadd.f32 %v101, %v207
    %v209 = vpop.f32.mrf.mxu0
    %v210 = vadd.f32 %v97, %v209
    %v211 = vpop.f32.mrf.mxu0
    %v212 = vadd.f32 %v101, %v211
    %213 = vmatprep.mubr.bf16.mxu0 0
    %214 = vmatmul.mubr.bf16.gmra.mxu0 %v123
    %v215 = vpop.f32.mrf.mxu0
    %v216 = vadd.f32 %v97, %v215
    %v217 = vpop.f32.mrf.mxu0
    %v218 = vadd.f32 %v101, %v217
    %v219 = vpop.f32.mrf.mxu0
    %v220 = vadd.f32 %v97, %v219
    %v221 = vpop.f32.mrf.mxu0
    %v222 = vadd.f32 %v101, %v221
    %223 = vmatprep.mubr.bf16.mxu0 0
    %224 = vmatmul.mubr.bf16.gmra.mxu0 %v126
    %v225 = vpop.f32.mrf.mxu0
    %v226 = vadd.f32 %v97, %v225
    %v227 = vpop.f32.mrf.mxu0
    %v228 = vadd.f32 %v101, %v227
    %v229 = vpop.f32.mrf.mxu0
    %v230 = vadd.f32 %v97, %v229
    %v231 = vpop.f32.mrf.mxu0
    %v232 = vadd.f32 %v101, %v231
    %233 = vmatprep.mubr.bf16.mxu0 0
    %234 = vmatmul.mubr.bf16.gmra.mxu0 %v129
    %v235 = vpop.f32.mrf.mxu0
    %v236 = vadd.f32 %v97, %v235
    %v237 = vpop.f32.mrf.mxu0
    %v238 = vadd.f32 %v101, %v237
    %v239 = vpop.f32.mrf.mxu0
    %v240 = vadd.f32 %v97, %v239
    %v241 = vpop.f32.mrf.mxu0
    %v242 = vadd.f32 %v101, %v241
    %243 = vmatprep.mubr.bf16.mxu0 0
    %244 = vmatmul.mubr.bf16.gmra.mxu0 %v132
    %v245 = vpop.f32.mrf.mxu0
    %v246 = vadd.f32 %v97, %v245
    %v247 = vpop.f32.mrf.mxu0
    %v248 = vadd.f32 %v101, %v247
    %v249 = vpop.f32.mrf.mxu0
    %v250 = vadd.f32 %v97, %v249
    %v251 = vpop.f32.mrf.mxu0
    %v252 = vadd.f32 %v101, %v251
    %253 = vdwg.mxu0
    %v254 = vmax.f32 %v176, 0.0
    %v255 = vmax.f32 %v178, 0.0
    %v256 = vmax.f32 %v180, 0.0
    %v257 = vmax.f32 %v182, 0.0
    %v258 = vmax.f32 %v186, 0.0
    %v259 = vmax.f32 %v188, 0.0
    %v260 = vmax.f32 %v190, 0.0
    %v261 = vmax.f32 %v192, 0.0
    %v262 = vmax.f32 %v196, 0.0
    %v263 = vmax.f32 %v198, 0.0
    %v264 = vmax.f32 %v200, 0.0
    %v265 = vmax.f32 %v202, 0.0
    %v266 = vmax.f32 %v206, 0.0
    %v267 = vmax.f32 %v208, 0.0
    %v268 = vmax.f32 %v210, 0.0
    %v269 = vmax.f32 %v212, 0.0
    %v270 = vmax.f32 %v216, 0.0
    %v271 = vmax.f32 %v218, 0.0
    %v272 = vmax.f32 %v220, 0.0
    %v273 = vmax.f32 %v222, 0.0
    %v274 = vmax.f32 %v226, 0.0
    %v275 = vmax.f32 %v228, 0.0
    %v276 = vmax.f32 %v230, 0.0
    %v277 = vmax.f32 %v232, 0.0
    %v278 = vmax.f32 %v236, 0.0
    %v279 = vmax.f32 %v238, 0.0
    %v280 = vmax.f32 %v240, 0.0
    %v281 = vmax.f32 %v242, 0.0
    %v282 = vmax.f32 %v246, 0.0
    %v283 = vmax.f32 %v248, 0.0
    %v284 = vmax.f32 %v250, 0.0
    %v285 = vmax.f32 %v252, 0.0
    %v286 = vpack.c.bf16 %v256, %v254
    %v287 = vpack.c.bf16 %v257, %v255
    %v288 = vpack.c.bf16 %v260, %v258
    %v289 = vpack.c.bf16 %v261, %v259
    %v290 = vpack.c.bf16 %v264, %v262
    %v291 = vpack.c.bf16 %v265, %v263
    %v292 = vpack.c.bf16 %v268, %v266
    %v293 = vpack.c.bf16 %v269, %v267
    %v294 = vpack.c.bf16 %v272, %v270
    %v295 = vpack.c.bf16 %v273, %v271
    %v296 = vpack.c.bf16 %v276, %v274
    %v297 = vpack.c.bf16 %v277, %v275
    %v298 = vpack.c.bf16 %v280, %v278
    %v299 = vpack.c.bf16 %v281, %v279
    %v300 = vpack.c.bf16 %v284, %v282
    %v301 = vpack.c.bf16 %v285, %v283
    %v302 = vld [vmem:[#allocation7] sm:$0xff]
    %v303 = vld [vmem:[#allocation7 + $0x8] sm:$0xff]
    %v304 = vld [vmem:[#allocation7 + $0x10] sm:$0xff]
    %v305 = vld [vmem:[#allocation7 + $0x18] sm:$0xff]
    %v306 = vld [vmem:[#allocation7 + $0x20] sm:$0xff]
    %v307 = vld [vmem:[#allocation7 + $0x28] sm:$0xff]
    %v308 = vld [vmem:[#allocation7 + $0x30] sm:$0xff]
    %v309 = vld [vmem:[#allocation7 + $0x38] sm:$0xff]
    %v310 = vld [vmem:[#allocation7 + $0x40] sm:$0xff]
    %v311 = vld [vmem:[#allocation7 + $0x48] sm:$0xff]
    %v312 = vld [vmem:[#allocation7 + $0x50] sm:$0xff]
    %v313 = vld [vmem:[#allocation7 + $0x58] sm:$0xff]
    %v314 = vld [vmem:[#allocation7 + $0x60] sm:$0xff]
    %v315 = vld [vmem:[#allocation7 + $0x68] sm:$0xff]
    %v316 = vld [vmem:[#allocation7 + $0x70] sm:$0xff]
    %v317 = vld [vmem:[#allocation7 + $0x78] sm:$0xff]
    %v318 = vld [vmem:[#allocation7 + $0x80] sm:$0xff]
    %v319 = vld [vmem:[#allocation7 + $0x88] sm:$0xff]
    %v320 = vld [vmem:[#allocation7 + $0x90] sm:$0xff]
    %v321 = vld [vmem:[#allocation7 + $0x98] sm:$0xff]
    %v322 = vld [vmem:[#allocation7 + $0xa0] sm:$0xff]
    %v323 = vld [vmem:[#allocation7 + $0xa8] sm:$0xff]
    %v324 = vld [vmem:[#allocation7 + $0xb0] sm:$0xff]
    %v325 = vld [vmem:[#allocation7 + $0xb8] sm:$0xff]
    %v326 = vld [vmem:[#allocation7 + $0xc0] sm:$0xff]
    %v327 = vld [vmem:[#allocation7 + $0xc8] sm:$0xff]
    %v328 = vld [vmem:[#allocation7 + $0xd0] sm:$0xff]
    %v329 = vld [vmem:[#allocation7 + $0xd8] sm:$0xff]
    %v330 = vld [vmem:[#allocation7 + $0xe0] sm:$0xff]
    %v331 = vld [vmem:[#allocation7 + $0xe8] sm:$0xff]
    %v332 = vld [vmem:[#allocation7 + $0xf0] sm:$0xff]
    %v333 = vld [vmem:[#allocation7 + $0xf8] sm:$0xff]
    %v334 = vld [vmem:[%s4] sm:$0x3]
    %v336 = vlaneseq
    %v337 = vshrl.u32 %v336, 7
    %v338 = vsub.s32 0, %v337
    %v339 = vrot.slane %v334, %v338
    %v340 = vlaneseq
    %v341 = vshrl.u32 %v340, 7
    %v342 = vsub.s32 1, %v341
    %v343 = vrot.slane %v334, %v342
    %v378 = vunpack.c.l.b16 %v302
    %v379 = vunpack.c.h.b16 %v302
    %v380 = vunpack.c.l.b16 %v303
    %v381 = vunpack.c.h.b16 %v303
    %v382 = vunpack.c.l.b16 %v304
    %v383 = vunpack.c.h.b16 %v304
    %v384 = vunpack.c.l.b16 %v305
    %v385 = vunpack.c.h.b16 %v305
    %v386 = vunpack.c.l.b16 %v306
    %v387 = vunpack.c.h.b16 %v306
    %v388 = vunpack.c.l.b16 %v307
    %v389 = vunpack.c.h.b16 %v307
    %v390 = vunpack.c.l.b16 %v308
    %v391 = vunpack.c.h.b16 %v308
    %v392 = vunpack.c.l.b16 %v309
    %v393 = vunpack.c.h.b16 %v309
    %v394 = vunpack.c.l.b16 %v310
    %v395 = vunpack.c.h.b16 %v310
    %v396 = vunpack.c.l.b16 %v311
    %v397 = vunpack.c.h.b16 %v311
    %v398 = vunpack.c.l.b16 %v312
    %v399 = vunpack.c.h.b16 %v312
    %v400 = vunpack.c.l.b16 %v313
    %v401 = vunpack.c.h.b16 %v313
    %v402 = vunpack.c.l.b16 %v314
    %v403 = vunpack.c.h.b16 %v314
    %v404 = vunpack.c.l.b16 %v315
    %v405 = vunpack.c.h.b16 %v315
    %v406 = vunpack.c.l.b16 %v316
    %v407 = vunpack.c.h.b16 %v316
    %v408 = vunpack.c.l.b16 %v317
    %v409 = vunpack.c.h.b16 %v317
    %v410 = vunpack.c.l.b16 %v318
    %v411 = vunpack.c.h.b16 %v318
    %v412 = vunpack.c.l.b16 %v319
    %v413 = vunpack.c.h.b16 %v319
    %v414 = vunpack.c.l.b16 %v320
    %v415 = vunpack.c.h.b16 %v320
    %v416 = vunpack.c.l.b16 %v321
    %v417 = vunpack.c.h.b16 %v321
    %v418 = vunpack.c.l.b16 %v322
    %v419 = vunpack.c.h.b16 %v322
    %v420 = vunpack.c.l.b16 %v323
    %v421 = vunpack.c.h.b16 %v323
    %v422 = vunpack.c.l.b16 %v324
    %v423 = vunpack.c.h.b16 %v324
    %v424 = vunpack.c.l.b16 %v325
    %v425 = vunpack.c.h.b16 %v325
    %v426 = vunpack.c.l.b16 %v326
    %v427 = vunpack.c.h.b16 %v326
    %v428 = vunpack.c.l.b16 %v327
    %v429 = vunpack.c.h.b16 %v327
    %v430 = vunpack.c.l.b16 %v328
    %v431 = vunpack.c.h.b16 %v328
    %v432 = vunpack.c.l.b16 %v329
    %v433 = vunpack.c.h.b16 %v329
    %v434 = vunpack.c.l.b16 %v330
    %v435 = vunpack.c.h.b16 %v330
    %v436 = vunpack.c.l.b16 %v331
    %v437 = vunpack.c.h.b16 %v331
    %v438 = vunpack.c.l.b16 %v332
    %v439 = vunpack.c.h.b16 %v332
    %v440 = vunpack.c.l.b16 %v333
    %v441 = vunpack.c.h.b16 %v333
    %v442 = vpack.c.b16 %v380, %v378
    %v443 = vpack.c.b16 %v381, %v379
    %v444 = vpack.c.b16 %v384, %v382
    %v445 = vpack.c.b16 %v385, %v383
    %v446 = vpack.c.b16 %v388, %v386
    %v447 = vpack.c.b16 %v389, %v387
    %v448 = vpack.c.b16 %v392, %v390
    %v449 = vpack.c.b16 %v393, %v391
    %v450 = vpack.c.b16 %v396, %v394
    %v451 = vpack.c.b16 %v397, %v395
    %v452 = vpack.c.b16 %v400, %v398
    %v453 = vpack.c.b16 %v401, %v399
    %v454 = vpack.c.b16 %v404, %v402
    %v455 = vpack.c.b16 %v405, %v403
    %v456 = vpack.c.b16 %v408, %v406
    %v457 = vpack.c.b16 %v409, %v407
    %v458 = vpack.c.b16 %v412, %v410
    %v459 = vpack.c.b16 %v413, %v411
    %v460 = vpack.c.b16 %v416, %v414
    %v461 = vpack.c.b16 %v417, %v415
    %v462 = vpack.c.b16 %v420, %v418
    %v463 = vpack.c.b16 %v421, %v419
    %v464 = vpack.c.b16 %v424, %v422
    %v465 = vpack.c.b16 %v425, %v423
    %v466 = vpack.c.b16 %v428, %v426
    %v467 = vpack.c.b16 %v429, %v427
    %v468 = vpack.c.b16 %v432, %v430
    %v469 = vpack.c.b16 %v433, %v431
    %v470 = vpack.c.b16 %v436, %v434
    %v471 = vpack.c.b16 %v437, %v435
    %v472 = vpack.c.b16 %v440, %v438
    %v473 = vpack.c.b16 %v441, %v439
    %506 = vmatprep.subr.bf16.mxu0 %v457
    %507 = vmatpush1.bf16.msra.mxu0 %v456
    %508 = vmatprep.subr.bf16.mxu0 %v455
    %509 = vmatpush1.bf16.msra.mxu0 %v454
    %510 = vmatprep.subr.bf16.mxu0 %v453
    %511 = vmatpush1.bf16.msra.mxu0 %v452
    %512 = vmatprep.subr.bf16.mxu0 %v451
    %513 = vmatpush1.bf16.msra.mxu0 %v450
    %514 = vmatprep.subr.bf16.mxu0 %v449
    %515 = vmatpush1.bf16.msra.mxu0 %v448
    %516 = vmatprep.subr.bf16.mxu0 %v447
    %517 = vmatpush1.bf16.msra.mxu0 %v446
    %518 = vmatprep.subr.bf16.mxu0 %v445
    %519 = vmatpush1.bf16.msra.mxu0 %v444
    %520 = vmatprep.subr.bf16.mxu0 %v443
    %521 = vmatpush1.bf16.msra.mxu0 %v442
    %522 = vmatprep.subr.bf16.mxu0 %v473
    %523 = vmatpush2.bf16.msra.mxu0 %v472
    %524 = vmatprep.subr.bf16.mxu0 %v471
    %525 = vmatpush2.bf16.msra.mxu0 %v470
    %526 = vmatprep.subr.bf16.mxu0 %v469
    %527 = vmatpush2.bf16.msra.mxu0 %v468
    %528 = vmatprep.subr.bf16.mxu0 %v467
    %529 = vmatpush2.bf16.msra.mxu0 %v466
    %530 = vmatprep.subr.bf16.mxu0 %v465
    %531 = vmatpush2.bf16.msra.mxu0 %v464
    %532 = vmatprep.subr.bf16.mxu0 %v463
    %533 = vmatpush2.bf16.msra.mxu0 %v462
    %534 = vmatprep.subr.bf16.mxu0 %v461
    %535 = vmatpush2.bf16.msra.mxu0 %v460
    %536 = vmatprep.subr.bf16.mxu0 %v459
    %537 = vmatpush2.bf16.msra.mxu0 %v458
    %538 = vmatprep.mubr.bf16.mxu0 %v287
    %539 = vmatmul.mubr.bf16.gmra.mxu0 %v286
    %v540 = vpop.f32.mrf.mxu0
    %v541 = vadd.f32 %v339, %v540
    %v542 = vpop.f32.mrf.mxu0
    %v543 = vadd.f32 %v343, %v542
    %v544 = vpop.f32.mrf.mxu0
    %v545 = vadd.f32 %v339, %v544
    %v546 = vpop.f32.mrf.mxu0
    %v547 = vadd.f32 %v343, %v546
    %548 = vmatprep.mubr.bf16.mxu0 %v289
    %549 = vmatmul.mubr.bf16.gmra.mxu0 %v288
    %v550 = vpop.f32.mrf.mxu0
    %v551 = vadd.f32 %v339, %v550
    %v552 = vpop.f32.mrf.mxu0
    %v553 = vadd.f32 %v343, %v552
    %v554 = vpop.f32.mrf.mxu0
    %v555 = vadd.f32 %v339, %v554
    %v556 = vpop.f32.mrf.mxu0
    %v557 = vadd.f32 %v343, %v556
    %558 = vmatprep.mubr.bf16.mxu0 %v291
    %559 = vmatmul.mubr.bf16.gmra.mxu0 %v290
    %v560 = vpop.f32.mrf.mxu0
    %v561 = vadd.f32 %v339, %v560
    %v562 = vpop.f32.mrf.mxu0
    %v563 = vadd.f32 %v343, %v562
    %v564 = vpop.f32.mrf.mxu0
    %v565 = vadd.f32 %v339, %v564
    %v566 = vpop.f32.mrf.mxu0
    %v567 = vadd.f32 %v343, %v566
    %568 = vmatprep.mubr.bf16.mxu0 %v293
    %569 = vmatmul.mubr.bf16.gmra.mxu0 %v292
    %v570 = vpop.f32.mrf.mxu0
    %v571 = vadd.f32 %v339, %v570
    %v572 = vpop.f32.mrf.mxu0
    %v573 = vadd.f32 %v343, %v572
    %v574 = vpop.f32.mrf.mxu0
    %v575 = vadd.f32 %v339, %v574
    %v576 = vpop.f32.mrf.mxu0
    %v577 = vadd.f32 %v343, %v576
    %578 = vmatprep.mubr.bf16.mxu0 %v295
    %579 = vmatmul.mubr.bf16.gmra.mxu0 %v294
    %v580 = vpop.f32.mrf.mxu0
    %v581 = vadd.f32 %v339, %v580
    %v582 = vpop.f32.mrf.mxu0
    %v583 = vadd.f32 %v343, %v582
    %v584 = vpop.f32.mrf.mxu0
    %v585 = vadd.f32 %v339, %v584
    %v586 = vpop.f32.mrf.mxu0
    %v587 = vadd.f32 %v343, %v586
    %588 = vmatprep.mubr.bf16.mxu0 %v297
    %589 = vmatmul.mubr.bf16.gmra.mxu0 %v296
    %v590 = vpop.f32.mrf.mxu0
    %v591 = vadd.f32 %v339, %v590
    %v592 = vpop.f32.mrf.mxu0
    %v593 = vadd.f32 %v343, %v592
    %v594 = vpop.f32.mrf.mxu0
    %v595 = vadd.f32 %v339, %v594
    %v596 = vpop.f32.mrf.mxu0
    %v597 = vadd.f32 %v343, %v596
    %598 = vmatprep.mubr.bf16.mxu0 %v299
    %599 = vmatmul.mubr.bf16.gmra.mxu0 %v298
    %v600 = vpop.f32.mrf.mxu0
    %v601 = vadd.f32 %v339, %v600
    %v602 = vpop.f32.mrf.mxu0
    %v603 = vadd.f32 %v343, %v602
    %v604 = vpop.f32.mrf.mxu0
    %v605 = vadd.f32 %v339, %v604
    %v606 = vpop.f32.mrf.mxu0
    %v607 = vadd.f32 %v343, %v606
    %608 = vmatprep.mubr.bf16.mxu0 %v301
    %609 = vmatmul.mubr.bf16.gmra.mxu0 %v300
    %v610 = vpop.f32.mrf.mxu0
    %v611 = vadd.f32 %v339, %v610
    %v612 = vpop.f32.mrf.mxu0
    %v613 = vadd.f32 %v343, %v612
    %v614 = vpop.f32.mrf.mxu0
    %v615 = vadd.f32 %v339, %v614
    %v616 = vpop.f32.mrf.mxu0
    %v617 = vadd.f32 %v343, %v616
    %618 = vdwg.mxu0
    %v619 = vmax.f32 %v541, 0.0
    %v620 = vmax.f32 %v543, 0.0
    %v621 = vmax.f32 %v545, 0.0
    %v622 = vmax.f32 %v547, 0.0
    %v623 = vmax.f32 %v551, 0.0
    %v624 = vmax.f32 %v553, 0.0
    %v625 = vmax.f32 %v555, 0.0
    %v626 = vmax.f32 %v557, 0.0
    %v627 = vmax.f32 %v561, 0.0
    %v628 = vmax.f32 %v563, 0.0
    %v629 = vmax.f32 %v565, 0.0
    %v630 = vmax.f32 %v567, 0.0
    %v631 = vmax.f32 %v571, 0.0
    %v632 = vmax.f32 %v573, 0.0
    %v633 = vmax.f32 %v575, 0.0
    %v634 = vmax.f32 %v577, 0.0
    %v635 = vmax.f32 %v581, 0.0
    %v636 = vmax.f32 %v583, 0.0
    %v637 = vmax.f32 %v585, 0.0
    %v638 = vmax.f32 %v587, 0.0
    %v639 = vmax.f32 %v591, 0.0
    %v640 = vmax.f32 %v593, 0.0
    %v641 = vmax.f32 %v595, 0.0
    %v642 = vmax.f32 %v597, 0.0
    %v643 = vmax.f32 %v601, 0.0
    %v644 = vmax.f32 %v603, 0.0
    %v645 = vmax.f32 %v605, 0.0
    %v646 = vmax.f32 %v607, 0.0
    %v647 = vmax.f32 %v611, 0.0
    %v648 = vmax.f32 %v613, 0.0
    %v649 = vmax.f32 %v615, 0.0
    %v650 = vmax.f32 %v617, 0.0
    %v651 = vld [vmem:[%s5] sm:$0x3]
    %v653 = vlaneseq
    %v654 = vshrl.u32 %v653, 7
    %v655 = vsub.s32 0, %v654
    %v656 = vrot.slane %v651, %v655
    %v657 = vlaneseq
    %v658 = vshrl.u32 %v657, 7
    %v659 = vsub.s32 1, %v658
    %v660 = vrot.slane %v651, %v659
    %v663 = vmul.f32 %v619, %v656
    %v664 = vmul.f32 %v620, %v660
    %v665 = vmul.f32 %v621, %v656
    %v666 = vmul.f32 %v622, %v660
    %v667 = vmul.f32 %v623, %v656
    %v668 = vmul.f32 %v624, %v660
    %v669 = vmul.f32 %v625, %v656
    %v670 = vmul.f32 %v626, %v660
    %v671 = vmul.f32 %v627, %v656
    %v672 = vmul.f32 %v628, %v660
    %v673 = vmul.f32 %v629, %v656
    %v674 = vmul.f32 %v630, %v660
    %v675 = vmul.f32 %v631, %v656
    %v676 = vmul.f32 %v632, %v660
    %v677 = vmul.f32 %v633, %v656
    %v678 = vmul.f32 %v634, %v660
    %v679 = vmul.f32 %v635, %v656
    %v680 = vmul.f32 %v636, %v660
    %v681 = vmul.f32 %v637, %v656
    %v682 = vmul.f32 %v638, %v660
    %v683 = vmul.f32 %v639, %v656
    %v684 = vmul.f32 %v640, %v660
    %v685 = vmul.f32 %v641, %v656
    %v686 = vmul.f32 %v642, %v660
    %v687 = vmul.f32 %v643, %v656
    %v688 = vmul.f32 %v644, %v660
    %v689 = vmul.f32 %v645, %v656
    %v690 = vmul.f32 %v646, %v660
    %v691 = vmul.f32 %v647, %v656
    %v692 = vmul.f32 %v648, %v660
    %v693 = vmul.f32 %v649, %v656
    %v694 = vmul.f32 %v650, %v660
    %v695 = vadd.f32 %v663, %v664
    %696 = vadd.xlane.f32.xlu0 %v695
    %v697 = vpop.xlane.xlu0 %696
    %v698 = vadd.f32 %v665, %v666
    %699 = vadd.xlane.f32.xlu0 %v698
    %v700 = vpop.xlane.xlu0 %699
    %v701 = vadd.f32 %v667, %v668
    %702 = vadd.xlane.f32.xlu0 %v701
    %v703 = vpop.xlane.xlu0 %702
    %v704 = vadd.f32 %v669, %v670
    %705 = vadd.xlane.f32.xlu0 %v704
    %v706 = vpop.xlane.xlu0 %705
    %v707 = vadd.f32 %v671, %v672
    %708 = vadd.xlane.f32.xlu0 %v707
    %v709 = vpop.xlane.xlu0 %708
    %v710 = vadd.f32 %v673, %v674
    %711 = vadd.xlane.f32.xlu0 %v710
    %v712 = vpop.xlane.xlu0 %711
    %v713 = vadd.f32 %v675, %v676
    %714 = vadd.xlane.f32.xlu0 %v713
    %v715 = vpop.xlane.xlu0 %714
    %v716 = vadd.f32 %v677, %v678
    %717 = vadd.xlane.f32.xlu0 %v716
    %v718 = vpop.xlane.xlu0 %717
    %v719 = vadd.f32 %v679, %v680
    %720 = vadd.xlane.f32.xlu0 %v719
    %v721 = vpop.xlane.xlu0 %720
    %v722 = vadd.f32 %v681, %v682
    %723 = vadd.xlane.f32.xlu0 %v722
    %v724 = vpop.xlane.xlu0 %723
    %v725 = vadd.f32 %v683, %v684
    %726 = vadd.xlane.f32.xlu0 %v725
    %v727 = vpop.xlane.xlu0 %726
    %v728 = vadd.f32 %v685, %v686
    %729 = vadd.xlane.f32.xlu0 %v728
    %v730 = vpop.xlane.xlu0 %729
    %v731 = vadd.f32 %v687, %v688
    %732 = vadd.xlane.f32.xlu0 %v731
    %v733 = vpop.xlane.xlu0 %732
    %v734 = vadd.f32 %v689, %v690
    %735 = vadd.xlane.f32.xlu0 %v734
    %v736 = vpop.xlane.xlu0 %735
    %v737 = vadd.f32 %v691, %v692
    %738 = vadd.xlane.f32.xlu0 %v737
    %v739 = vpop.xlane.xlu0 %738
    %v740 = vadd.f32 %v693, %v694
    %741 = vadd.xlane.f32.xlu0 %v740
    %v742 = vpop.xlane.xlu0 %741
    %s743 = sld [smem:[#allocation2]]
    %v744 = vstv %s743
    %v745 = vadd.f32 %v697, %v744
    %v746 = vadd.f32 %v700, %v744
    %v747 = vadd.f32 %v703, %v744
    %v748 = vadd.f32 %v706, %v744
    %v749 = vadd.f32 %v709, %v744
    %v750 = vadd.f32 %v712, %v744
    %v751 = vadd.f32 %v715, %v744
    %v752 = vadd.f32 %v718, %v744
    %v753 = vadd.f32 %v721, %v744
    %v754 = vadd.f32 %v724, %v744
    %v755 = vadd.f32 %v727, %v744
    %v756 = vadd.f32 %v730, %v744
    %v757 = vadd.f32 %v733, %v744
    %v758 = vadd.f32 %v736, %v744
    %v759 = vadd.f32 %v739, %v744
    %v760 = vadd.f32 %v742, %v744
    %vm761 = vcmask 7168
    %762 = vst.msk [vmem:[#allocation8] sm:$0xff] %vm761, %v745
    %763 = vst.msk [vmem:[#allocation8 + $0x8] sm:$0xff] %vm761, %v746
    %764 = vst.msk [vmem:[#allocation8 + $0x10] sm:$0xff] %vm761, %v747
    %765 = vst.msk [vmem:[#allocation8 + $0x18] sm:$0xff] %vm761, %v748
    %766 = vst.msk [vmem:[#allocation8 + $0x20] sm:$0xff] %vm761, %v749
    %767 = vst.msk [vmem:[#allocation8 + $0x28] sm:$0xff] %vm761, %v750
    %768 = vst.msk [vmem:[#allocation8 + $0x30] sm:$0xff] %vm761, %v751
    %769 = vst.msk [vmem:[#allocation8 + $0x38] sm:$0xff] %vm761, %v752
    %770 = vst.msk [vmem:[#allocation8 + $0x40] sm:$0xff] %vm761, %v753
    %771 = vst.msk [vmem:[#allocation8 + $0x48] sm:$0xff] %vm761, %v754
    %772 = vst.msk [vmem:[#allocation8 + $0x50] sm:$0xff] %vm761, %v755
    %773 = vst.msk [vmem:[#allocation8 + $0x58] sm:$0xff] %vm761, %v756
    %774 = vst.msk [vmem:[#allocation8 + $0x60] sm:$0xff] %vm761, %v757
    %775 = vst.msk [vmem:[#allocation8 + $0x68] sm:$0xff] %vm761, %v758
    %776 = vst.msk [vmem:[#allocation8 + $0x70] sm:$0xff] %vm761, %v759
    %777 = vst.msk [vmem:[#allocation8 + $0x78] sm:$0xff] %vm761, %v760
    // Predicated region
    $region42: #{critic_forward.1} parent=1 // pred_check
      _
    $region43: #{critic_forward.1} parent=1 // pred_check_branch
      %779 = sbr.rel (0) target = $region45
    $region44: #{critic_forward.1} parent=1 // pred_region
      // Predicated region
      $region46: #{critic_forward.1} parent=44 // pred_check
        _
      $region47: #{critic_forward.1} parent=44 // pred_check_branch
        %781 = sbr.rel (0) target = $region49
      $region48: #{critic_forward.1} parent=44 // pred_region
        // Predicated region
        $region50: #{critic_forward.1} parent=48 // pred_check
          _
        $region51: #{critic_forward.1} parent=48 // pred_check_branch
          %783 = sbr.rel (0) target = $region53
        $region52: #{critic_forward.1} parent=48 // pred_region
          // Predicated region
          $region65: #{critic_forward.1} parent=52 // pred_check
            _
          $region66: #{critic_forward.1} parent=52 // pred_check_branch
            %799 = sbr.rel (0) target = $region68
          $region67: #{critic_forward.1} parent=52 // pred_region
            loop: start=0, step=1, limit=1
            $region69: #{critic_forward.1} parent=67 // loop_pre_header
              _
            $region70: #{critic_forward.1} parent=67 // loop_header
              %s801 = sphi 0, %s805
              %p802 = scmp.ge.s32.totalorder %s801, 1
              %s806 = sphi [#allocation8], [#allocation8]
              %s807 = sphi %s7, %s7
            $region71: #{critic_forward.1} parent=67 // loop_header_branch
              %804 = sbr.rel (%p802) target = $region75
            $region72: #{critic_forward.1} parent=67 // loop_body
              %v808 = vld [vmem:[%s806] sm:$0xff]
              %809 = vst [vmem:[%s807] sm:$0xff] %v808
            $region73: #{critic_forward.1} parent=67 // loop_footer
              %s805 = sadd.s32 1, %s801
            $region74: #{critic_forward.1} parent=67 // loop_footer_branch
              %800 = sbr.rel target = $region70
            $region75: #{critic_forward.1} parent=67 // loop_exit
              _
          $region68: #{critic_forward.1} parent=52 // pred_fallthru
            _
          // Predicated region
          $region76: #{critic_forward.1} parent=52 // pred_check
            _
          $region77: #{critic_forward.1} parent=52 // pred_check_branch
            %811 = sbr.rel target = $region79
          $region78: #{critic_forward.1} parent=52 // pred_region
            _
          $region79: #{critic_forward.1} parent=52 // pred_fallthru
            _
        $region53: #{critic_forward.1} parent=48 // pred_fallthru
          _
        // Predicated region
        $region54: #{critic_forward.1} parent=48 // pred_check
          _
        $region55: #{critic_forward.1} parent=48 // pred_check_branch
          %785 = sbr.rel target = $region57
        $region56: #{critic_forward.1} parent=48 // pred_region
          %s787 = ssub.s32 256, 1
          loop: start=0, step=1, limit=1
          $region58: #{critic_forward.1} parent=56 // loop_pre_header
            _
          $region59: #{critic_forward.1} parent=56 // loop_header
            %s789 = sphi 0, %s793
            %p790 = scmp.ge.s32.totalorder %s789, 1
            %s794 = sphi [#allocation8], [#allocation8]
            %s795 = sphi %s7, %s7
          $region60: #{critic_forward.1} parent=56 // loop_header_branch
            %792 = sbr.rel (%p790) target = $region64
          $region61: #{critic_forward.1} parent=56 // loop_body
            %v796 = vld [vmem:[%s794] sm:%s787]
            %797 = vst [vmem:[%s795] sm:%s787] %v796
          $region62: #{critic_forward.1} parent=56 // loop_footer
            %s793 = sadd.s32 1, %s789
          $region63: #{critic_forward.1} parent=56 // loop_footer_branch
            %788 = sbr.rel target = $region59
          $region64: #{critic_forward.1} parent=56 // loop_exit
            _
        $region57: #{critic_forward.1} parent=48 // pred_fallthru
          _
      $region49: #{critic_forward.1} parent=44 // pred_fallthru
        _
      %812 = vnop
    $region45: #{critic_forward.1} parent=1 // pred_fallthru
      _
    // Predicated region
    $region80: #{critic_forward.1} parent=1 // pred_check
      _
    $region81: #{critic_forward.1} parent=1 // pred_check_branch
      %814 = sbr.rel (0) target = $region83
    $region82: #{critic_forward.1} parent=1 // pred_region
      _
    $region83: #{critic_forward.1} parent=1 // pred_fallthru
      _
    %815 = vsyncpa [#allocation4], 1
    %816 = vsyncpa [#allocation6], 1

</llo_original>
